<compile_context>
chip_gen: v7x
topology: tpu7x:2x2x1
jax: 0.10.0
libtpu: 0.0.40
codegen_flags: <defaults>
</compile_context>

<pallas_src>
import math
from functools import partial

import jax
import jax.numpy as jnp
from jax.experimental import pallas as pl
from jax.experimental.pallas import tpu as pltpu

# Per-block budget for the logits tile.  Double-buffered by the pipeline, so
# the kernel's VMEM use is ~2x this plus the small per-pixel blocks — fits the
# v7x 64 MiB VMEM with headroom, and trivially fits v5e/v6e's 128 MiB.
_MAX_TILE_BYTES = 8 * 1024 * 1024


def _pick_tile(hw, c):
    """Largest lane tile (multiple of 128, or full hw) fitting the pred budget."""
    bytes_per_col = 4 * c                     # one f32 logits column
    max_cols = max(128, _MAX_TILE_BYTES // bytes_per_col)
    if hw <= max_cols:
        return hw                             # single full-dim block along pixels
    return max(128, (max_cols // 128) * 128)


# ---------------------------------------------------------------------------
# Fused kernel: one pass over the logits, emitting both candidate CE terms
# (w.r.t. the target class and w.r.t. class 0) packed as a (2, T) block.
# ---------------------------------------------------------------------------
def _ohem_fused_kernel(pred_ref, target_ref, loss_ref):
    x = pred_ref[0].astype(jnp.float32)                     # (C, T)
    t = target_ref[0]                                       # (1, T) int32

    m = jnp.max(x, axis=0, keepdims=True)                   # (1, T)
    e = jnp.exp(x - m)
    s = jnp.sum(e, axis=0, keepdims=True)                   # (1, T)
    lse = m + jnp.log(s)                                    # (1, T)

    cls = jax.lax.broadcasted_iota(jnp.int32, x.shape, 0)   # (C, T)
    tgt_logit = jnp.sum(jnp.where(cls == t, x, 0.0), axis=0, keepdims=True)

    # Single packed store: row 0 = CE(target), row 1 = CE(class 0).
    loss_ref[0] = jnp.concatenate([lse - tgt_logit, lse - x[0:1, :]], axis=0)


def _ohem_pass1(logits, target):
    """logits: (B, C, HW) f32, target: (B, 1, HW) i32 -> (B, 2, HW) f32."""
    b, c, hw = logits.shape
    tile = _pick_tile(hw, c)
    grid = (pl.cdiv(hw, tile), b)             # long pixel axis first (v7x 2-TC split)

    # Actual per-step VMEM footprint (pred + target + packed loss output),
    # double-buffered, plus slack; floor at the standard 32 MiB scoped limit.
    block_bytes = tile * (4 * c + 4 + 8)
    vmem_limit = min(max(2 * block_bytes + (8 << 20), 32 << 20), 56 << 20)

    return pl.pallas_call(
        _ohem_fused_kernel,
        out_shape=jax.ShapeDtypeStruct((b, 2, hw), jnp.float32),
        grid_spec=pltpu.PrefetchScalarGridSpec(
            num_scalar_prefetch=0,
            grid=grid,
            in_specs=[pl.BlockSpec((1, c, tile), lambda j, i: (i, 0, j)),
                      pl.BlockSpec((1, 1, tile), lambda j, i: (i, 0, j))],
            out_specs=pl.BlockSpec((1, 2, tile), lambda j, i: (i, 0, j))),
        compiler_params=pltpu.CompilerParams(
            dimension_semantics=("parallel", "parallel"),
            vmem_limit_bytes=vmem_limit),
    )(logits, target)


# ---------------------------------------------------------------------------
# Module forward: OhemCrossEntropy2dTensor(thresh, min_kept).forward(pred, tgt)
# ---------------------------------------------------------------------------
@partial(jax.jit, static_argnames=("thresh", "min_kept"))
def ohem_cross_entropy_2d(pred, target, thresh=0.7, min_kept=256):
    """pred: (B, C, H, W) float logits; target: (B, H, W) int labels."""
    b, c, h, w = pred.shape
    hw = h * w
    n = b * hw

    logits = pred.reshape(b, c, hw).astype(jnp.float32)      # free reshape, no transpose
    tgt3 = target.reshape(b, 1, hw).astype(jnp.int32)

    loss_pair = _ohem_pass1(logits, tgt3)                    # (B, 2, HW)
    loss_t = loss_pair[:, 0, :].reshape(n)
    loss_0 = loss_pair[:, 1, :].reshape(n)

    num_valid = n
    if (min_kept <= num_valid) and (num_valid > 0) and (min_kept > 0):
        # Selection entirely in loss space:  prob <= p  <=>  loss_t >= -log(p).
        thresh_loss = jnp.float32(-math.log(float(thresh)))
        k = min(num_valid, min_kept)

        # If at least min_kept pixels already exceed the static threshold, the
        # data-dependent k-th value cannot raise it -> skip the full-N top_k.
        cnt = jnp.sum((loss_t >= thresh_loss).astype(jnp.int32))

        def _with_topk(lt):
            kth_loss = jax.lax.top_k(lt, k)[0][k - 1]        # k-th largest loss
            return jnp.minimum(kth_loss, thresh_loss)        # == -log(max(kth_prob, thresh))

        thr_loss = jax.lax.cond(cnt >= k,
                                lambda lt: thresh_loss,
                                _with_topk,
                                loss_t)

        # Discarded pixels were remapped to class 0 (target * kept_mask) and
        # still contribute to the mean (no ignore_index in the spec module).
        loss = jnp.where(loss_t >= thr_loss, loss_t, loss_0)
    else:
        loss = loss_t

    return jnp.mean(loss)


# ---------------------------------------------------------------------------
# Pure-JAX reference (correctness check only, mirrors the PyTorch module)
# ---------------------------------------------------------------------------
def _reference(pred, target, thresh=0.7, min_kept=256):
    b, c, h, w = pred.shape
    n = b * h * w
    t = target.reshape(-1).astype(jnp.int32)
    prob = jax.nn.softmax(pred, axis=1)
    prob = jnp.transpose(prob, (1, 0, 2, 3)).reshape(c, -1)
    if (min_kept <= n) and (n > 0) and (min_kept > 0):
        mask_prob = prob[t, jnp.arange(n)]
        sp = jnp.sort(mask_prob)
        kth = sp[min(n, min_kept) - 1]
        threshold = jnp.where(kth > jnp.float32(thresh), kth, jnp.float32(thresh))
        kept = (mask_prob <= threshold).astype(jnp.int32)
        t = t * kept
    logits = jnp.transpose(pred, (1, 0, 2, 3)).reshape(c, -1)
    log_z = jax.nn.logsumexp(logits, axis=0)
    tgt_logit = logits[t, jnp.arange(n)]
    return jnp.mean(log_z - tgt_logit)


if __name__ == "__main__":
    key = jax.random.PRNGKey(0)
    kp, kt = jax.random.split(key)
    b, c, h, w = 2, 4, 16, 16
    pred = jax.random.normal(kp, (b, c, h, w), dtype=jnp.float32)
    target = jax.random.randint(kt, (b, h, w), 0, c, dtype=jnp.int32)

    loss = ohem_cross_entropy_2d(pred, target, thresh=0.7, min_kept=256)
    loss = jax.block_until_ready(loss)

    ref = _reference(pred, target, thresh=0.7, min_kept=256)
    assert jnp.allclose(loss, ref, atol=1e-5, rtol=1e-5), (float(loss), float(ref))

    print("KERNEL_OK")
</pallas_src>

<mosaic_0001>
module attributes {stable_mosaic.version = 11 : i64} {
  func.func @_ohem_fused_kernel(%arg0: i32, %arg1: i32, %arg2: memref<1x4x256xf32, #tpu.memory_space<vmem>>, %arg3: memref<1x1x256xi32, #tpu.memory_space<vmem>>, %arg4: memref<1x2x256xf32, #tpu.memory_space<vmem>>) attributes {dimension_semantics = [#tpu.dimension_semantics<parallel>, #tpu.dimension_semantics<parallel>], iteration_bounds = array<i64: 1, 2>, scalar_prefetch = 0 : i64, scratch_operands = 0 : i64, tpu.core_type = #tpu.core_type<tc>, window_params = [{transform_indices = @transform_0, window_bounds = array<i64: 1, 4, 256>}, {transform_indices = @transform_1, window_bounds = array<i64: 1, 1, 256>}, {transform_indices = @transform_2, window_bounds = array<i64: 1, 2, 256>}]} {
    %c0 = arith.constant 0 : index
    %c0_0 = arith.constant 0 : index
    %c0_1 = arith.constant 0 : index
    %0 = vector.load %arg2[%c0, %c0_0, %c0_1] : memref<1x4x256xf32, #tpu.memory_space<vmem>>, vector<1x4x256xf32>
    %1 = vector.shape_cast %0 : vector<1x4x256xf32> to vector<4x256xf32>
    %c0_2 = arith.constant 0 : index
    %c0_3 = arith.constant 0 : index
    %c0_4 = arith.constant 0 : index
    %2 = vector.load %arg3[%c0_2, %c0_3, %c0_4] : memref<1x1x256xi32, #tpu.memory_space<vmem>>, vector<1x1x256xi32>
    %3 = vector.shape_cast %2 : vector<1x1x256xi32> to vector<1x256xi32>
    %cst = arith.constant dense<0xFF800000> : vector<256xf32>
    %4 = vector.multi_reduction <maximumf>, %1, %cst [0] : vector<4x256xf32> to vector<256xf32>
    %5 = vector.shape_cast %4 : vector<256xf32> to vector<1x256xf32>
    %6 = vector.broadcast %5 : vector<1x256xf32> to vector<4x256xf32>
    %7 = arith.subf %1, %6 : vector<4x256xf32>
    %8 = math.exp %7 : vector<4x256xf32>
    %cst_5 = arith.constant dense<0.000000e+00> : vector<256xf32>
    %9 = vector.multi_reduction <add>, %8, %cst_5 [0] : vector<4x256xf32> to vector<256xf32>
    %10 = vector.shape_cast %9 : vector<256xf32> to vector<1x256xf32>
    %11 = math.log %10 : vector<1x256xf32>
    %12 = arith.addf %5, %11 : vector<1x256xf32>
    %13 = tpu.iota {dimensions = array<i32: 0>} : vector<4x256xi32>
    %14 = vector.broadcast %3 : vector<1x256xi32> to vector<4x256xi32>
    %15 = arith.cmpi eq, %13, %14 : vector<4x256xi32>
    %cst_6 = arith.constant 0.000000e+00 : f32
    %16 = vector.broadcast %cst_6 : f32 to vector<4x256xf32>
    %17 = arith.select %15, %1, %16 : vector<4x256xi1>, vector<4x256xf32>
    %cst_7 = arith.constant dense<0.000000e+00> : vector<256xf32>
    %18 = vector.multi_reduction <add>, %17, %cst_7 [0] : vector<4x256xf32> to vector<256xf32>
    %19 = vector.shape_cast %18 : vector<256xf32> to vector<1x256xf32>
    %20 = arith.subf %12, %19 : vector<1x256xf32>
    %21 = vector.extract_strided_slice %1 {offsets = [0, 0], sizes = [1, 256], strides = [1, 1]} : vector<4x256xf32> to vector<1x256xf32>
    %22 = arith.subf %12, %21 : vector<1x256xf32>
    %23 = tpu.concatenate %20, %22 in 0 : vector<1x256xf32>, vector<1x256xf32> -> vector<2x256xf32>
    %c0_8 = arith.constant 0 : index
    %c0_9 = arith.constant 0 : index
    %c0_10 = arith.constant 0 : index
    %24 = vector.load %arg4[%c0_8, %c0_9, %c0_10] : memref<1x2x256xf32, #tpu.memory_space<vmem>>, vector<1x2x256xf32>
    %25 = vector.shape_cast %24 : vector<1x2x256xf32> to vector<2x256xf32>
    %26 = vector.shape_cast %23 : vector<2x256xf32> to vector<1x2x256xf32>
    tpu.vector_store %arg4[%c0_8, %c0_9, %c0_10], %26 {strides = array<i32>} : memref<1x2x256xf32, #tpu.memory_space<vmem>>, vector<1x2x256xf32>,
    return
  }
  func.func @transform_0(%arg0: i32, %arg1: i32) -> (i32, i32, i32) {
    %c0_i32 = arith.constant 0 : i32
    %c0_i32_0 = arith.constant 0 : i32
    return %arg1, %c0_i32, %arg0 : i32, i32, i32
  }
  func.func @transform_1(%arg0: i32, %arg1: i32) -> (i32, i32, i32) {
    %c0_i32 = arith.constant 0 : i32
    %c0_i32_0 = arith.constant 0 : i32
    return %arg1, %c0_i32, %arg0 : i32, i32, i32
  }
  func.func @transform_2(%arg0: i32, %arg1: i32) -> (i32, i32, i32) {
    %c0_i32 = arith.constant 0 : i32
    %c0_i32_0 = arith.constant 0 : i32
    return %arg1, %c0_i32, %arg0 : i32, i32, i32
  }
}

</mosaic_0001>

<llo_original>
// kernel: ohem_cross_entropy_2d.1
$region0: #{ohem_cross_entropy_2d.1}
  #allocation0 [shape = 'u32[]', space=smem, size = 0x4, offset = 0x4, fixed_abs, tag = 'smem constant byte address 0x4 - core index']
  #allocation1 [shape = 'u32[144,128]{1,0:T(1,128)}', space=vmem, size = 0x12000, scoped, tag = 'internal scratch']
  %s0 = inlined_call_operand.vmem [shape: f32[2,4,256], index: 0, kind: input, shape index: {}]
  %s1 = inlined_call_operand.vmem [shape: s32[2,1,256], index: 1, kind: input, shape index: {}]
  %s2 = inlined_call_operand.vmem [shape: f32[2,2,256], index: 2, kind: output, shape index: {}]
  %s3 = sld [smem:[#allocation0]]
  $region41: #{ohem_cross_entropy_2d.1} parent=0
    _
  %s5 = ssub.s32 1, %s3
  %s6 = scalar_select 0, %s5, %s3
  loop: start=0, step=1, limit=4
  $region2: #{ohem_cross_entropy_2d.1} parent=0 // loop_pre_header
    _
  $region3: #{ohem_cross_entropy_2d.1} parent=0 // loop_header
    %s8 = sphi 0, %s12
    %p9 = scmp.ge.s32.totalorder %s8, 4
    %s15 = sphi 0, %s27
    %s16 = sphi 0, %s23
    %s17 = sphi 0, %s15
    %s18 = sphi 0, %s16
    %s19 = sphi 0, %s17
    %s20 = sphi 0, %s18
    %s32 = sphi 0, %s34
    %s35 = sphi 0, %s32
    %s36 = sphi 0, %s35
    %s52 = sphi 0, %s36
    %s60 = sphi 0, %s62
    %s63 = sphi 0, %s60
    %s64 = sphi 0, %s63
    %s80 = sphi 0, %s64
    %s88 = sphi 0, %s90
    %s91 = sphi 0, %s88
    %s92 = sphi 0, %s91
    %s108 = sphi 0, %s92
  $region4: #{ohem_cross_entropy_2d.1} parent=0 // loop_header_branch
    %11 = sbr.rel (%p9) target = $region8
  $region5: #{ohem_cross_entropy_2d.1} parent=0 // loop_body
    %s13 = ssub.s32 %s8, 1
    %s14 = ssub.s32 %s8, 2
    %s21 = sadd.s32 1, %s16
    %p22 = scmp.ge.s32.totalorder %s21, 2
    %s23 = scalar_select %p22, 0, %s21
    %s24 = sadd.s32 1, %s15
    %s25 = scalar_select %p22, %s24, %s15
    %p26 = scmp.ge.s32.totalorder %s25, 1
    %s27 = scalar_select %p26, 0, %s25
    %s28 = ssub.s32 %s16, %s23
    %s29 = ssub.s32 %s15, %s27
    %s30 = sor.u32 %s28, %s29
    %p31 = scmp.eq.s32.totalorder %s30, 0
    %s33 = sadd.s32 %s32, 1
    %s34 = scalar_select %p31, %s32, %s33
    %p37 = pneg %p31
    %p38 = scmp.eq.s32.totalorder %s8, 1
    %p39 = por %p37, %p38
    %p40 = scmp.ne.s32.totalorder %s32, %s35
    %p41 = scmp.eq.s32.totalorder %s8, 0
    %p42 = por %p40, %p41
    %p43 = scmp.ne.s32.totalorder %s32, %s35
    %p44 = scmp.eq.s32.totalorder %s13, 1
    %p45 = por %p43, %p44
    %p46 = scmp.ne.s32.totalorder %s35, %s36
    %p47 = scmp.eq.s32.totalorder %s13, 0
    %p48 = por %p46, %p47
    %p49 = scmp.ne.s32.totalorder %s35, %s36
    %p50 = scmp.eq.s32.totalorder %s14, 1
    %p51 = por %p49, %p50
    %p53 = scmp.ne.s32.totalorder %s36, %s52
    %p54 = scmp.eq.s32.totalorder %s14, 0
    %p55 = por %p53, %p54
    %s56 = ssub.s32 %s16, %s23
    %s57 = ssub.s32 %s15, %s27
    %s58 = sor.u32 %s56, %s57
    %p59 = scmp.eq.s32.totalorder %s58, 0
    %s61 = sadd.s32 %s60, 1
    %s62 = scalar_select %p59, %s60, %s61
    %p65 = pneg %p59
    %p66 = scmp.eq.s32.totalorder %s8, 1
    %p67 = por %p65, %p66
    %p68 = scmp.ne.s32.totalorder %s60, %s63
    %p69 = scmp.eq.s32.totalorder %s8, 0
    %p70 = por %p68, %p69
    %p71 = scmp.ne.s32.totalorder %s60, %s63
    %p72 = scmp.eq.s32.totalorder %s13, 1
    %p73 = por %p71, %p72
    %p74 = scmp.ne.s32.totalorder %s63, %s64
    %p75 = scmp.eq.s32.totalorder %s13, 0
    %p76 = por %p74, %p75
    %p77 = scmp.ne.s32.totalorder %s63, %s64
    %p78 = scmp.eq.s32.totalorder %s14, 1
    %p79 = por %p77, %p78
    %p81 = scmp.ne.s32.totalorder %s64, %s80
    %p82 = scmp.eq.s32.totalorder %s14, 0
    %p83 = por %p81, %p82
    %s84 = ssub.s32 %s16, %s23
    %s85 = ssub.s32 %s15, %s27
    %s86 = sor.u32 %s84, %s85
    %p87 = scmp.eq.s32.totalorder %s86, 0
    %s89 = sadd.s32 %s88, 1
    %s90 = scalar_select %p87, %s88, %s89
    %p93 = pneg %p87
    %p94 = scmp.eq.s32.totalorder %s8, 1
    %p95 = por %p93, %p94
    %p96 = scmp.ne.s32.totalorder %s88, %s91
    %p97 = scmp.eq.s32.totalorder %s8, 0
    %p98 = por %p96, %p97
    %p99 = scmp.ne.s32.totalorder %s88, %s91
    %p100 = scmp.eq.s32.totalorder %s13, 1
    %p101 = por %p99, %p100
    %p102 = scmp.ne.s32.totalorder %s91, %s92
    %p103 = scmp.eq.s32.totalorder %s13, 0
    %p104 = por %p102, %p103
    %p105 = scmp.ne.s32.totalorder %s91, %s92
    %p106 = scmp.eq.s32.totalorder %s14, 1
    %p107 = por %p105, %p106
    %p109 = scmp.ne.s32.totalorder %s92, %s108
    %p110 = scmp.eq.s32.totalorder %s14, 0
    %p111 = por %p109, %p110
    %p112 = scmp.le.s32.totalorder 1, %s8
    %p113 = scmp.lt.s32.totalorder %s8, 3
    %p114 = pnand %p112, %p113
    %p115 = pneg %p114
    // Predicated region
    $region9: #{ohem_cross_entropy_2d.1} parent=5 // pred_check
      _
    $region10: #{ohem_cross_entropy_2d.1} parent=5 // pred_check_branch
      %117 = sbr.rel (%p114) target = $region12
    $region11: #{ohem_cross_entropy_2d.1} parent=5 // pred_region
      %s118 = ssub.s32 %s8, 1
    $region12: #{ohem_cross_entropy_2d.1} parent=5 // pred_fallthru
      _
    %p119 = scmp.lt.s32.totalorder %s8, 2
    // Predicated region
    $region13: #{ohem_cross_entropy_2d.1} parent=5 // pred_check
      %p120 = pneg %p119
    $region14: #{ohem_cross_entropy_2d.1} parent=5 // pred_check_branch
      %122 = sbr.rel (%p120) target = $region16
    $region15: #{ohem_cross_entropy_2d.1} parent=5 // pred_region
      // Predicated region
      $region17: #{ohem_cross_entropy_2d.1} parent=15 // pred_check
        %p123 = pneg %p42
      $region18: #{ohem_cross_entropy_2d.1} parent=15 // pred_check_branch
        %125 = sbr.rel (%p123) target = $region20
      $region19: #{ohem_cross_entropy_2d.1} parent=15 // pred_region
        %s126 = smul.u32 2, %s15
        %p127 = scmp.lt.s32.totalorder %s16, 1
        %s128 = scalar_select %p127, %s16, 1
        %p129 = scmp.lt.s32.totalorder %s126, 1
        %s130 = scalar_select %p129, %s126, 1
        %s131 = smul.addr %s128, 2
        %s132 = sadd.s32 %s130, %s131
        %s133 = smul.addr %s132, 4
        %s134 = scalar_lea.vmem %s0, %s133
        %s135 = smul.u32 2, %s15
      $region20: #{ohem_cross_entropy_2d.1} parent=15 // pred_fallthru
        _
      // Predicated region
      $region21: #{ohem_cross_entropy_2d.1} parent=15 // pred_check
        %p136 = pneg %p70
      $region22: #{ohem_cross_entropy_2d.1} parent=15 // pred_check_branch
        %138 = sbr.rel (%p136) target = $region24
      $region23: #{ohem_cross_entropy_2d.1} parent=15 // pred_region
        %s139 = smul.u32 2, %s15
        %p140 = scmp.lt.s32.totalorder %s16, 1
        %s141 = scalar_select %p140, %s16, 1
        %p142 = scmp.lt.s32.totalorder %s139, 1
        %s143 = scalar_select %p142, %s139, 1
        %s144 = smul.addr %s141, 2
        %s145 = sadd.s32 %s143, %s144
        %s146 = scalar_lea.vmem %s1, %s145
        %s147 = smul.u32 2, %s15
      $region24: #{ohem_cross_entropy_2d.1} parent=15 // pred_fallthru
        _
    $region16: #{ohem_cross_entropy_2d.1} parent=5 // pred_fallthru
      _
    %p148 = scmp.le.s32.totalorder 1, %s8
    %p149 = scmp.lt.s32.totalorder %s8, 3
    %p150 = pnand %p148, %p149
    %p151 = pneg %p150
    // Predicated region
    $region25: #{ohem_cross_entropy_2d.1} parent=5 // pred_check
      _
    $region26: #{ohem_cross_entropy_2d.1} parent=5 // pred_check_branch
      %153 = sbr.rel (%p150) target = $region28
    $region27: #{ohem_cross_entropy_2d.1} parent=5 // pred_region
      %s154 = ssub.s32 %s8, 1
      %s155 = smul.u32 2, %s17
      %p156 = scmp.lt.s32.totalorder %s18, 1
      %s157 = scalar_select %p156, %s18, 1
      %p158 = scmp.lt.s32.totalorder %s155, 1
      %s159 = scalar_select %p158, %s155, 1
      %s160 = smul.addr %s157, 2
      %s161 = sadd.s32 %s159, %s160
      %s162 = smul.addr %s161, 4
      %s163 = scalar_lea.vmem %s0, %s162
      %p164 = pneg %p48
      %p165 = pneg %p45
      %s166 = smul.u32 2, %s17
      %p167 = scmp.lt.s32.totalorder %s18, 1
      %s168 = scalar_select %p167, %s18, 1
      %p169 = scmp.lt.s32.totalorder %s166, 1
      %s170 = scalar_select %p169, %s166, 1
      %s171 = smul.addr %s168, 2
      %s172 = sadd.s32 %s170, %s171
      %s173 = scalar_lea.vmem %s1, %s172
      %p174 = pneg %p76
      %p175 = pneg %p73
      %p176 = pneg %p104
      %p177 = pneg %p101
      %s178 = smul.u32 2, %s17
      %p179 = scmp.lt.s32.totalorder %s18, 1
      %s180 = scalar_select %p179, %s18, 1
      %p181 = scmp.lt.s32.totalorder %s178, 1
      %s182 = scalar_select %p181, %s178, 1
      %s183 = smul.addr %s180, 2
      %s184 = sadd.s32 %s182, %s183
      %s185 = smul.addr %s184, 2
      %s186 = scalar_lea.vmem %s2, %s185
      %s187 = smul.u32 2, %s17
      %p188 = scmp.lt.s32.totalorder %s18, 1
      %s189 = scalar_select %p188, %s18, 1
      %p190 = scmp.lt.s32.totalorder %s187, 1
      %s191 = scalar_select %p190, %s187, 1
      %s192 = smul.addr %s189, 2
      %s193 = sadd.s32 %s191, %s192
      %s194 = smul.addr %s193, 4
      %s195 = scalar_lea.vmem %s0, %s194
      %s196 = smul.u32 2, %s17
      %s197 = smul.u32 2, %s17
      %p198 = scmp.lt.s32.totalorder %s18, 1
      %s199 = scalar_select %p198, %s18, 1
      %p200 = scmp.lt.s32.totalorder %s197, 1
      %s201 = scalar_select %p200, %s197, 1
      %s202 = smul.addr %s199, 2
      %s203 = sadd.s32 %s201, %s202
      %s204 = scalar_lea.vmem %s1, %s203
      %s205 = smul.u32 2, %s17
      %s206 = smul.u32 2, %s17
      %p207 = scmp.lt.s32.totalorder %s18, 1
      %s208 = scalar_select %p207, %s18, 1
      %p209 = scmp.lt.s32.totalorder %s206, 1
      %s210 = scalar_select %p209, %s206, 1
      %s211 = smul.addr %s208, 2
      %s212 = sadd.s32 %s210, %s211
      %s213 = smul.addr %s212, 2
      %s214 = scalar_lea.vmem %s2, %s213
      %s215 = smul.u32 2, %s17
      %v216 = vld [vmem:[%s195] sm:$0xff]
      %v217 = vld [vmem:[%s204] sm:$0x3]
      %v219 = vcombine.high %v216, %v216
      %vm221 = vcmask 1043456
      %v222 = vsel %vm221, %v216, -inf
      %v223 = vrot.slane %v222, 4
      %v224 = vmax.f32 %v222, %v223
      %v225 = vrot.slane %v224, 2
      %v226 = vmax.f32 %v224, %v225
      %v227 = vrot.slane %v226, 1
      %v228 = vmax.f32 %v226, %v227
      %v229 = vsel %vm221, %v219, -inf
      %v230 = vrot.slane %v229, 4
      %v231 = vmax.f32 %v229, %v230
      %v232 = vrot.slane %v231, 2
      %v233 = vmax.f32 %v231, %v232
      %v234 = vrot.slane %v233, 1
      %v235 = vmax.f32 %v233, %v234
      %v238 = vcombine.low %v228, %v235
      %v240 = vsub.f32 %v216, %v238
      %v241 = vmul.f32 %v240, 1.442695
      %v242 = vpow.pop %v241
      %v244 = vcombine.high %v242, %v242
      %v246 = vsel %vm221, %v242, 0.0
      %v247 = vrot.slane %v246, 4
      %v248 = vadd.f32 %v246, %v247
      %v249 = vrot.slane %v248, 2
      %v250 = vadd.f32 %v248, %v249
      %v251 = vrot.slane %v250, 1
      %v252 = vadd.f32 %v250, %v251
      %v253 = vsel %vm221, %v244, 0.0
      %v254 = vrot.slane %v253, 4
      %v255 = vadd.f32 %v253, %v254
      %v256 = vrot.slane %v255, 2
      %v257 = vadd.f32 %v255, %v256
      %v258 = vrot.slane %v257, 1
      %v259 = vadd.f32 %v257, %v258
      %v260 = vlog2.pop %v252
      %v261 = vmul.f32 %v260, 0.6931472
      %v262 = vlog2.pop %v259
      %v263 = vmul.f32 %v262, 0.6931472
      %v264 = vadd.f32 %v228, %v261
      %v265 = vadd.f32 %v235, %v263
      %v266 = vlaneseq
      %v267 = vshrl.u32 %v266, 7
      %v268 = vlaneseq
      %v269 = vshrl.u32 %v268, 7
      %v270 = vsub.s32 0, %v269
      %v271 = vrot.slane %v217, %v270
      %v272 = vlaneseq
      %v273 = vshrl.u32 %v272, 7
      %v274 = vsub.s32 1, %v273
      %v275 = vrot.slane %v217, %v274
      %vm276 = vcmp.eq.s32.totalorder %v267, %v271
      %vm277 = vcmp.eq.s32.totalorder %v267, %v275
      %v278 = vsel %vm276, %v216, 0.0
      %v279 = vsel %vm277, %v219, 0.0
      %v280 = vsel %vm221, %v278, 0.0
      %v281 = vrot.slane %v280, 4
      %v282 = vadd.f32 %v280, %v281
      %v283 = vrot.slane %v282, 2
      %v284 = vadd.f32 %v282, %v283
      %v285 = vrot.slane %v284, 1
      %v286 = vadd.f32 %v284, %v285
      %v287 = vsel %vm221, %v279, 0.0
      %v288 = vrot.slane %v287, 4
      %v289 = vadd.f32 %v287, %v288
      %v290 = vrot.slane %v289, 2
      %v291 = vadd.f32 %v289, %v290
      %v292 = vrot.slane %v291, 1
      %v293 = vadd.f32 %v291, %v292
      %v294 = vsub.f32 %v264, %v286
      %v295 = vsub.f32 %v265, %v293
      %v296 = vlaneseq
      %v297 = vshrl.u32 %v296, 7
      %v298 = vsub.s32 0, %v297
      %v299 = vrot.slane %v216, %v298
      %v300 = vlaneseq
      %v301 = vshrl.u32 %v300, 7
      %v302 = vsub.s32 4, %v301
      %v303 = vrot.slane %v216, %v302
      %v306 = vsub.f32 %v264, %v299
      %v307 = vsub.f32 %v265, %v303
      %v310 = vrot.slane %v306, 7
      %v311 = vrot.slane %v307, 7
      %vm314 = vcmask 1040384
      %v315 = vsel %vm314, %v294, %v310
      %v316 = vsel %vm314, %v295, %v311
      %v319 = vcombine.low %v315, %v316
      %v321 = vunpack.c.l.s4 1983009808
      %v322 = vunpack.c.0.s8 %v321
      %v323 = vlaneseq
      %v324 = vshrl.u32 %v323, 7
      %v325 = vsub.s32 %v322, %v324
      %v326 = vrot.slane %v319, %v325
      %328 = vst [vmem:[%s214] sm:$0xf] %v326
      %s329 = smul.u32 2, %s17
      %p330 = scmp.lt.s32.totalorder %s18, 1
      %s331 = scalar_select %p330, %s18, 1
      %p332 = scmp.lt.s32.totalorder %s329, 1
      %s333 = scalar_select %p332, %s329, 1
      %s334 = smul.addr %s331, 2
      %s335 = sadd.s32 %s333, %s334
      %s336 = smul.addr %s335, 2
      %s337 = scalar_lea.vmem %s2, %s336
      // Predicated region
      $region29: #{ohem_cross_entropy_2d.1} parent=27 // pred_check
        %p338 = pneg %p101
      $region30: #{ohem_cross_entropy_2d.1} parent=27 // pred_check_branch
        %340 = sbr.rel (%p338) target = $region32
      $region31: #{ohem_cross_entropy_2d.1} parent=27 // pred_region
        %s341 = smul.u32 2, %s17
      $region32: #{ohem_cross_entropy_2d.1} parent=27 // pred_fallthru
        _
    $region28: #{ohem_cross_entropy_2d.1} parent=5 // pred_fallthru
      _
    %p342 = scmp.le.s32.totalorder 2, %s8
    // Predicated region
    $region33: #{ohem_cross_entropy_2d.1} parent=5 // pred_check
      %p343 = pneg %p342
    $region34: #{ohem_cross_entropy_2d.1} parent=5 // pred_check_branch
      %345 = sbr.rel (%p343) target = $region36
    $region35: #{ohem_cross_entropy_2d.1} parent=5 // pred_region
      %s346 = ssub.s32 %s8, 2
      // Predicated region
      $region37: #{ohem_cross_entropy_2d.1} parent=35 // pred_check
        %p347 = pneg %p107
      $region38: #{ohem_cross_entropy_2d.1} parent=35 // pred_check_branch
        %349 = sbr.rel (%p347) target = $region40
      $region39: #{ohem_cross_entropy_2d.1} parent=35 // pred_region
        %s350 = smul.u32 2, %s19
        %p351 = scmp.lt.s32.totalorder %s20, 1
        %s352 = scalar_select %p351, %s20, 1
        %p353 = scmp.lt.s32.totalorder %s350, 1
        %s354 = scalar_select %p353, %s350, 1
        %s355 = smul.addr %s352, 2
        %s356 = sadd.s32 %s354, %s355
        %s357 = smul.addr %s356, 2
        %s358 = scalar_lea.vmem %s2, %s357
      $region40: #{ohem_cross_entropy_2d.1} parent=35 // pred_fallthru
        _
    $region36: #{ohem_cross_entropy_2d.1} parent=5 // pred_fallthru
      _
  $region6: #{ohem_cross_entropy_2d.1} parent=0 // loop_footer
    %s12 = sadd.s32 1, %s8
  $region7: #{ohem_cross_entropy_2d.1} parent=0 // loop_footer_branch
    %7 = sbr.rel target = $region3
  $region8: #{ohem_cross_entropy_2d.1} parent=0 // loop_exit
    _

</llo_original>
